<compile_context>
chip_gen: v5e
topology: v5e:2x2
jax: 0.10.0
libtpu: 0.0.40
codegen_flags: <defaults>
</compile_context>

<pallas_src>
import functools

import jax
import jax.numpy as jnp
from jax.experimental import pallas as pl
from jax.experimental.pallas import tpu as pltpu


# ----------------------------------------------------------------------------
# helpers
# ----------------------------------------------------------------------------
def _round_up(x, m):
    return (x + m - 1) // m * m


def _pick_tile(padded_extent, target):
    """Largest multiple of 128 that divides `padded_extent` and is <= target."""
    best = 128
    t = 128
    while t <= padded_extent:
        if padded_extent % t == 0 and t <= target:
            best = t
        t += 128
    return best


def _vmem_limit_bytes(resident_bytes):
    # v5e's default scoped VMEM is only 16 MiB (128 MiB physical) -> raise it;
    # v7x's physical VMEM is 64 MiB -> never request more than that.
    return int(min(max(2 * resident_bytes, 32 * 1024 * 1024), 64 * 1024 * 1024))


@functools.lru_cache(maxsize=None)
def _mixed_dtype_dot_supported():
    """Probe whether an f32 x bf16 matmul lowers on this Mosaic build AND keeps
    full f32 precision of the wide operand (i.e. the bf16 operand is widened at
    the MXU feed rather than the f32 operand being truncated).  If not, the
    kernels below fall back to exact f32 adjacency handling."""

    def probe_kernel(a_ref, b_ref, o1_ref, o2_ref):
        a, b = a_ref[...], b_ref[...]
        o1_ref[...] = jax.lax.dot_general(
            a, b, (((1,), (0,)), ((), ())), preferred_element_type=jnp.float32)
        o2_ref[...] = jax.lax.dot_general(
            a, b, (((1,), (1,)), ((), ())), preferred_element_type=jnp.float32)

    try:
        a = jnp.full((8, 128), 1.0 + 2.0 ** -10, jnp.float32)
        b = jnp.ones((128, 128), jnp.bfloat16)
        o1, o2 = pl.pallas_call(
            probe_kernel,
            out_shape=(jax.ShapeDtypeStruct((8, 128), jnp.float32),
                       jax.ShapeDtypeStruct((8, 128), jnp.float32)),
        )(a, b)
        o1, o2 = jax.block_until_ready((o1, o2))
        expected = 128.0 * (1.0 + 2.0 ** -10)
        return bool(jnp.allclose(o1, expected, rtol=1e-6)
                    and jnp.allclose(o2, expected, rtol=1e-6))
    except Exception:
        # Mixed-dtype matmul not supported by this lowering -> exact fallback.
        return False


# ----------------------------------------------------------------------------
# 1) fused forward: both edge types x all prop steps, one adjacency resident
# ----------------------------------------------------------------------------
def _zoobp_fused_kernel(prop_step, xa_ref, xp_ref, ya0_ref, yp0_ref,
                        hap_ref, hpa_ref, at_ref, ya_o_ref, yp_o_ref):
    # at_ref: (Na, Np) = A_ap^T, the only resident adjacency.  bf16 (0/1 exact,
    # widened at the MXU feed) when the mixed-dtype matmul probe passed, else
    # exact f32.  No in-kernel copies / casts of the adjacency are made.
    a = at_ref[...]
    xa, xp = xa_ref[...], xp_ref[...]              # (d, Na), (d, Np)
    hap, hpa = hap_ref[...], hpa_ref[...]          # (d, d) = (eps*H)^T

    def step(_, carry):
        ya, yp = carry
        # tiny (d,d)@(d,N) message transforms (synchronous update: both read
        # the previous iterate)
        msg_a = jnp.dot(hap, ya, preferred_element_type=jnp.float32)   # (d, Na)
        msg_p = jnp.dot(hpa, yp, preferred_element_type=jnp.float32)   # (d, Np)
        # Y_p^T = X_p^T + msg_a @ A_ap^T
        yp_new = xp + jax.lax.dot_general(
            msg_a, a, (((1,), (0,)), ((), ())),
            preferred_element_type=jnp.float32)
        # Y_a^T = X_a^T + msg_p @ A_ap  (inverse edge type: contract both last
        # dims -> transposed-RHS matmul, no second adjacency copy)
        ya_new = xa + jax.lax.dot_general(
            msg_p, a, (((1,), (1,)), ((), ())),
            preferred_element_type=jnp.float32)
        return ya_new, yp_new

    ya, yp = jax.lax.fori_loop(0, prop_step, step,
                               (ya0_ref[...], yp0_ref[...]), unroll=True)
    ya_o_ref[...] = ya
    yp_o_ref[...] = yp


def zoobp_forward_fused(adj_ap, H_ap, H_pa, X_a, X_p, Y_a, Y_p, eps, prop_step):
    """Fused ZooBP forward for a 2-node-type graph with inverse edge types
    (adj_pa == adj_ap^T), everything resident in VMEM.

    adj_ap: (N_p, N_a) dense 0/1 adjacency of (author -> paper).
    Grid-free -> single TensorCore; route large graphs to the tiled path.
    """
    n_p, n_a = adj_ap.shape
    d = H_ap.shape[0]
    na_pad, np_pad = _round_up(n_a, 128), _round_up(n_p, 128)

    adj_dtype = jnp.bfloat16 if _mixed_dtype_dot_supported() else jnp.float32
    at_ap = jnp.pad(adj_ap.T.astype(adj_dtype),          # exact for 0/1 weights
                    ((0, na_pad - n_a), (0, np_pad - n_p)))

    def pad_a(m):
        return jnp.pad(m.T, ((0, 0), (0, na_pad - n_a)))

    def pad_p(m):
        return jnp.pad(m.T, ((0, 0), (0, np_pad - n_p)))

    resident = (at_ap.size * at_ap.dtype.itemsize
                + 6 * d * (na_pad + np_pad) * 4 + 2 * d * d * 4)

    ya_t, yp_t = pl.pallas_call(
        functools.partial(_zoobp_fused_kernel, int(prop_step)),
        out_shape=(jax.ShapeDtypeStruct((d, na_pad), jnp.float32),
                   jax.ShapeDtypeStruct((d, np_pad), jnp.float32)),
        compiler_params=pltpu.CompilerParams(
            vmem_limit_bytes=_vmem_limit_bytes(resident)),
    )(pad_a(X_a), pad_p(X_p), pad_a(Y_a), pad_p(Y_p),
      (eps * H_ap).T, (eps * H_pa).T, at_ap)
    return ya_t[:, :n_a].T, yp_t[:, :n_p].T


# ----------------------------------------------------------------------------
# 2) general per-edge-type kernel, tiled (dst parallel, src arbitrary/K)
# ----------------------------------------------------------------------------
def _prop_etype_kernel(widen, a_ref, msg_ref, x_ref, o_ref, acc_ref):
    # a_ref  : (tk, bn) adjacency^T tile (bf16, 0/1 -> exact)
    # msg_ref: (d, tk) f32, hoisted (eps*H)^T @ Y_src^T slice
    # x_ref / o_ref: (d, bn) running partial belief / output
    # acc_ref: (d, bn) f32 accumulator scratch (persists across the K axis)
    k = pl.program_id(1)

    @pl.when(k == 0)
    def _init():
        acc_ref[...] = x_ref[...]

    a = a_ref[...]
    if widen:
        # Exact-f32 fallback: widen only this bounded (tk, bn) tile.
        a = a.astype(jnp.float32)
    acc_ref[...] += jax.lax.dot_general(
        msg_ref[...], a, (((1,), (0,)), ((), ())),
        preferred_element_type=jnp.float32)

    @pl.when(k == pl.num_programs(1) - 1)
    def _finalize():
        o_ref[...] = acc_ref[...]


def _propagate_etype_tiled(a_t, msg_t, x_t, *, tile_n=512, tile_k=2048):
    """out^T = x^T + msg @ a_t for one edge type.

    a_t : (K_pad, N_pad) padded adjacency^T (prepared ONCE per graph).
    msg : (d, K_pad) f32;  x_t: (d, N_pad) f32 running partial.
    """
    kp, np_ = a_t.shape
    d = msg_t.shape[0]
    bn = _pick_tile(np_, tile_n)
    tk = _pick_tile(kp, tile_k)
    grid = (np_ // bn, kp // tk)
    widen = not _mixed_dtype_dot_supported()

    block_bytes = (2 * tk * bn * a_t.dtype.itemsize      # double-buffered adj
                   + 2 * d * tk * 4 + 6 * d * bn * 4)    # msg / x / out / acc

    return pl.pallas_call(
        functools.partial(_prop_etype_kernel, widen),
        out_shape=jax.ShapeDtypeStruct((d, np_), jnp.float32),
        grid=grid,
        in_specs=[
            pl.BlockSpec((tk, bn), lambda j, k: (k, j)),   # adjacency^T tile
            pl.BlockSpec((d, tk), lambda j, k: (0, k)),    # message slice
            pl.BlockSpec((d, bn), lambda j, k: (0, j)),    # partial beliefs
        ],
        out_specs=pl.BlockSpec((d, bn), lambda j, k: (0, j)),
        scratch_shapes=[pltpu.VMEM((d, bn), jnp.float32)],
        compiler_params=pltpu.CompilerParams(
            dimension_semantics=("parallel", "arbitrary"),
            vmem_limit_bytes=_vmem_limit_bytes(block_bytes)),
    )(a_t, msg_t, x_t)


def zoobp_forward_tiled(adj, H, X, Y, eps, prop_step, num_nodes,
                        *, tile_n=512, tile_k=2048):
    """General heterograph ZooBP forward via the tiled per-edge-type kernel.

    adj: {(src, rel, dst): (N_dst, N_src) dense 0/1 adjacency}.
    All incoming edge-type contributions for a destination type are
    accumulated.  Adjacency transpose/cast/pad is done once per graph.
    """
    d = next(iter(H.values())).shape[0]
    pad = {nt: _round_up(int(n), 128) for nt, n in num_nodes.items()}

    # --- one-time (hoisted) prep: transposed, bf16-cast, 128-padded ---------
    a_t = {}
    for (src, rel, dst), A in adj.items():
        n_dst, n_src = A.shape
        a_t[(src, rel, dst)] = jnp.pad(
            A.T.astype(jnp.bfloat16),                     # exact for 0/1 weights
            ((0, pad[src] - n_src), (0, pad[dst] - n_dst)))
    h_t = {t: (eps * h).T for t, h in H.items()}          # fold eps into (d,d)
    x_t = {nt: jnp.pad(X[nt].T, ((0, 0), (0, pad[nt] - int(num_nodes[nt]))))
           for nt in num_nodes}
    y_t = {nt: jnp.pad(Y[nt].T, ((0, 0), (0, pad[nt] - int(num_nodes[nt]))))
           for nt in num_nodes}

    for _ in range(int(prop_step)):
        new_y = {nt: x_t[nt] for nt in num_nodes}
        for (src, rel, dst), at in a_t.items():
            t = f"{src}-{rel}-{dst}"
            # Grid-invariant message transform, hoisted out of the kernel.
            msg = jnp.dot(h_t[t], y_t[src], preferred_element_type=jnp.float32)
            new_y[dst] = _propagate_etype_tiled(at, msg, new_y[dst],
                                                tile_n=tile_n, tile_k=tile_k)
        y_t = new_y

    return {nt: y_t[nt][:, :int(num_nodes[nt])].T for nt in num_nodes}


# ----------------------------------------------------------------------------
# demo / self-check
# ----------------------------------------------------------------------------
if __name__ == "__main__":
    # ---- synthetic heterogeneous graph / config (deterministic) ------------
    d = 4                      # number of classes / belief dimension
    eps = 0.05                 # C.eps
    prop_step = 3              # C.prop_step
    c = 0.01                   # same constant as the PyTorch forward
    n_author, n_paper = 32, 64
    num_nodes = {"author": n_author, "paper": n_paper}
    category_dim_dict = {"author": d, "paper": d}
    canonical_etypes = [
        ("author", "writes", "paper"),
        ("paper", "written-by", "author"),
    ]

    # ---- H init, exactly as in ZooBP.__init__ (src_dim == dst_dim branch) --
    H = {}
    for (src, rel, dst) in canonical_etypes:
        H[f"{src}-{rel}-{dst}"] = jnp.eye(d, dtype=jnp.float32) - 1.0 / d

    # ---- deterministic graph data -------------------------------------------
    key = jax.random.PRNGKey(0)
    k_adj, k_lab_a, k_lab_p, k_tr_a, k_tr_p = jax.random.split(key, 5)
    A_ap = jax.random.bernoulli(k_adj, 0.2, (n_paper, n_author)).astype(jnp.float32)
    adj = {
        ("author", "writes", "paper"): A_ap,        # (N_dst=paper, N_src=author)
        ("paper", "written-by", "author"): A_ap.T,  # inverse edge type
    }
    labels = {
        "author": jax.random.randint(k_lab_a, (n_author,), 0, category_dim_dict["author"]),
        "paper": jax.random.randint(k_lab_p, (n_paper,), 0, category_dim_dict["paper"]),
    }
    train_mask = {
        "author": jax.random.bernoulli(k_tr_a, 0.5, (n_author,)),
        "paper": jax.random.bernoulli(k_tr_p, 0.5, (n_paper,)),
    }

    # ---- prior-belief initialization (plain-JAX glue, mirrors the forward) --
    X, Y = {}, {}
    for ntype in num_nodes:
        n = num_nodes[ntype]
        dim = category_dim_dict[ntype]
        tr = train_mask[ntype]
        x = jnp.zeros((n, d), jnp.float32)
        x = jnp.where(tr[:, None], -c, x)                       # X[tr_idx] = -c
        onehot = jax.nn.one_hot(labels[ntype], d, dtype=jnp.float32)
        x = x + jnp.where(tr[:, None], dim * c * onehot, 0.0)   # X[tr_idx, lbl] += dim*c
        X[ntype] = x
        Y[ntype] = x.at[:, dim:].set(0.0)                       # Y[:, dim:] = 0

    # ---- propagation via the fused kernel (primary path) --------------------
    # TODO(synk): ZooBP_Propagate source was not provided; we implement the
    # canonical ZooBP residual-belief update  Y_dst = X_dst + eps * A @ (Y_src @ H)
    # (edge weights w = 1), applied synchronously for prop_step iterations.
    Ya_fused, Yp_fused = zoobp_forward_fused(
        adj[("author", "writes", "paper")],
        H["author-writes-paper"], H["paper-written-by-author"],
        X["author"], X["paper"], Y["author"], Y["paper"],
        eps, prop_step)
    Y_fused = {"author": jax.block_until_ready(Ya_fused),
               "paper": jax.block_until_ready(Yp_fused)}

    # ---- propagation via the general tiled kernel (fallback path) -----------
    Y_tiled = zoobp_forward_tiled(adj, H, X, Y, eps, prop_step, num_nodes)
    Y_tiled = {k: jax.block_until_ready(v) for k, v in Y_tiled.items()}

    # ---- pure-JAX reference check --------------------------------------------
    Y_ref = Y
    for _ in range(prop_step):
        nxt = {nt: X[nt] for nt in num_nodes}
        for (src, rel, dst), A in adj.items():
            t = f"{src}-{rel}-{dst}"
            nxt[dst] = nxt[dst] + eps * (A @ (Y_ref[src] @ H[t]))
        Y_ref = nxt

    for ntype in num_nodes:
        assert jnp.allclose(Y_fused[ntype], Y_ref[ntype], atol=1e-5, rtol=1e-5), ("fused", ntype)
        assert jnp.allclose(Y_tiled[ntype], Y_ref[ntype], atol=1e-5, rtol=1e-5), ("tiled", ntype)

    print("KERNEL_OK")
</pallas_src>

<mosaic_0001>
module attributes {stable_mosaic.version = 11 : i64} {
  func.func @probe_kernel(%arg0: memref<8x128xf32, #tpu.memory_space<vmem>>, %arg1: memref<128x128xbf16, #tpu.memory_space<vmem>>, %arg2: memref<8x128xf32, #tpu.memory_space<vmem>>, %arg3: memref<8x128xf32, #tpu.memory_space<vmem>>) attributes {dimension_semantics = [], scalar_prefetch = 0 : i64, scratch_operands = 0 : i64, tpu.core_type = #tpu.core_type<tc>} {
    %c0 = arith.constant 0 : index
    %c0_0 = arith.constant 0 : index
    %0 = vector.load %arg0[%c0, %c0_0] : memref<8x128xf32, #tpu.memory_space<vmem>>, vector<8x128xf32>
    %c0_1 = arith.constant 0 : index
    %c0_2 = arith.constant 0 : index
    %1 = vector.load %arg1[%c0_1, %c0_2] : memref<128x128xbf16, #tpu.memory_space<vmem>>, vector<128x128xbf16>
    %cst = arith.constant dense<0.000000e+00> : vector<8x128xf32>
    %2 = tpu.matmul %0, %1, %cst {dimension_numbers = #tpu.dot_dimension_numbers<[1], [0], [0], [1], [0, 0, 1, 1], [], []>} : vector<8x128xf32>, vector<128x128xbf16>, vector<8x128xf32> -> vector<8x128xf32>
    %c0_3 = arith.constant 0 : index
    %c0_4 = arith.constant 0 : index
    %3 = vector.load %arg2[%c0_3, %c0_4] : memref<8x128xf32, #tpu.memory_space<vmem>>, vector<8x128xf32>
    tpu.vector_store %arg2[%c0_3, %c0_4], %2 {strides = array<i32>} : memref<8x128xf32, #tpu.memory_space<vmem>>, vector<8x128xf32>,
    %cst_5 = arith.constant dense<0.000000e+00> : vector<8x128xf32>
    %4 = tpu.matmul %0, %1, %cst_5 {dimension_numbers = #tpu.dot_dimension_numbers<[1], [1], [0], [0], [0, 0, 1, 0], [], []>} : vector<8x128xf32>, vector<128x128xbf16>, vector<8x128xf32> -> vector<8x128xf32>
    %c0_6 = arith.constant 0 : index
    %c0_7 = arith.constant 0 : index
    %5 = vector.load %arg3[%c0_6, %c0_7] : memref<8x128xf32, #tpu.memory_space<vmem>>, vector<8x128xf32>
    tpu.vector_store %arg3[%c0_6, %c0_7], %4 {strides = array<i32>} : memref<8x128xf32, #tpu.memory_space<vmem>>, vector<8x128xf32>,
    return
  }
}

module attributes {stable_mosaic.version = 11 : i64} {
  func.func @_zoobp_fused_kernel(%arg0: memref<4x128xf32, #tpu.memory_space<vmem>>, %arg1: memref<4x128xf32, #tpu.memory_space<vmem>>, %arg2: memref<4x128xf32, #tpu.memory_space<vmem>>, %arg3: memref<4x128xf32, #tpu.memory_space<vmem>>, %arg4: memref<4x4xf32, #tpu.memory_space<vmem>>, %arg5: memref<4x4xf32, #tpu.memory_space<vmem>>, %arg6: memref<128x128xf32, #tpu.memory_space<vmem>>, %arg7: memref<4x128xf32, #tpu.memory_space<vmem>>, %arg8: memref<4x128xf32, #tpu.memory_space<vmem>>) attributes {dimension_semantics = [], scalar_prefetch = 0 : i64, scratch_operands = 0 : i64, tpu.core_type = #tpu.core_type<tc>} {
    %c0 = arith.constant 0 : index
    %c0_0 = arith.constant 0 : index
    %0 = vector.load %arg6[%c0, %c0_0] : memref<128x128xf32, #tpu.memory_space<vmem>>, vector<128x128xf32>
    %c0_1 = arith.constant 0 : index
    %c0_2 = arith.constant 0 : index
    %1 = vector.load %arg0[%c0_1, %c0_2] : memref<4x128xf32, #tpu.memory_space<vmem>>, vector<4x128xf32>
    %c0_3 = arith.constant 0 : index
    %c0_4 = arith.constant 0 : index
    %2 = vector.load %arg1[%c0_3, %c0_4] : memref<4x128xf32, #tpu.memory_space<vmem>>, vector<4x128xf32>
    %c0_5 = arith.constant 0 : index
    %c0_6 = arith.constant 0 : index
    %3 = vector.load %arg4[%c0_5, %c0_6] : memref<4x4xf32, #tpu.memory_space<vmem>>, vector<4x4xf32>
    %c0_7 = arith.constant 0 : index
    %c0_8 = arith.constant 0 : index
    %4 = vector.load %arg5[%c0_7, %c0_8] : memref<4x4xf32, #tpu.memory_space<vmem>>, vector<4x4xf32>
    %c0_9 = arith.constant 0 : index
    %c0_10 = arith.constant 0 : index
    %5 = vector.load %arg2[%c0_9, %c0_10] : memref<4x128xf32, #tpu.memory_space<vmem>>, vector<4x128xf32>
    %c0_11 = arith.constant 0 : index
    %c0_12 = arith.constant 0 : index
    %6 = vector.load %arg3[%c0_11, %c0_12] : memref<4x128xf32, #tpu.memory_space<vmem>>, vector<4x128xf32>
    %c0_i32 = arith.constant 0 : i32
    %cst = arith.constant dense<0.000000e+00> : vector<4x128xf32>
    %7 = tpu.matmul %3, %5, %cst {dimension_numbers = #tpu.dot_dimension_numbers<[1], [0], [0], [1], [0, 0, 1, 1], [], []>} : vector<4x4xf32>, vector<4x128xf32>, vector<4x128xf32> -> vector<4x128xf32>
    %cst_13 = arith.constant dense<0.000000e+00> : vector<4x128xf32>
    %8 = tpu.matmul %4, %6, %cst_13 {dimension_numbers = #tpu.dot_dimension_numbers<[1], [0], [0], [1], [0, 0, 1, 1], [], []>} : vector<4x4xf32>, vector<4x128xf32>, vector<4x128xf32> -> vector<4x128xf32>
    %cst_14 = arith.constant dense<0.000000e+00> : vector<4x128xf32>
    %9 = tpu.matmul %7, %0, %cst_14 {dimension_numbers = #tpu.dot_dimension_numbers<[1], [0], [0], [1], [0, 0, 1, 1], [], []>} : vector<4x128xf32>, vector<128x128xf32>, vector<4x128xf32> -> vector<4x128xf32>
    %10 = arith.addf %2, %9 : vector<4x128xf32>
    %cst_15 = arith.constant dense<0.000000e+00> : vector<4x128xf32>
    %11 = tpu.matmul %8, %0, %cst_15 {dimension_numbers = #tpu.dot_dimension_numbers<[1], [1], [0], [0], [0, 0, 1, 0], [], []>} : vector<4x128xf32>, vector<128x128xf32>, vector<4x128xf32> -> vector<4x128xf32>
    %12 = arith.addf %1, %11 : vector<4x128xf32>
    %c1_i32 = arith.constant 1 : i32
    %cst_16 = arith.constant dense<0.000000e+00> : vector<4x128xf32>
    %13 = tpu.matmul %3, %12, %cst_16 {dimension_numbers = #tpu.dot_dimension_numbers<[1], [0], [0], [1], [0, 0, 1, 1], [], []>} : vector<4x4xf32>, vector<4x128xf32>, vector<4x128xf32> -> vector<4x128xf32>
    %cst_17 = arith.constant dense<0.000000e+00> : vector<4x128xf32>
    %14 = tpu.matmul %4, %10, %cst_17 {dimension_numbers = #tpu.dot_dimension_numbers<[1], [0], [0], [1], [0, 0, 1, 1], [], []>} : vector<4x4xf32>, vector<4x128xf32>, vector<4x128xf32> -> vector<4x128xf32>
    %cst_18 = arith.constant dense<0.000000e+00> : vector<4x128xf32>
    %15 = tpu.matmul %13, %0, %cst_18 {dimension_numbers = #tpu.dot_dimension_numbers<[1], [0], [0], [1], [0, 0, 1, 1], [], []>} : vector<4x128xf32>, vector<128x128xf32>, vector<4x128xf32> -> vector<4x128xf32>
    %16 = arith.addf %2, %15 : vector<4x128xf32>
    %cst_19 = arith.constant dense<0.000000e+00> : vector<4x128xf32>
    %17 = tpu.matmul %14, %0, %cst_19 {dimension_numbers = #tpu.dot_dimension_numbers<[1], [1], [0], [0], [0, 0, 1, 0], [], []>} : vector<4x128xf32>, vector<128x128xf32>, vector<4x128xf32> -> vector<4x128xf32>
    %18 = arith.addf %1, %17 : vector<4x128xf32>
    %c2_i32 = arith.constant 2 : i32
    %cst_20 = arith.constant dense<0.000000e+00> : vector<4x128xf32>
    %19 = tpu.matmul %3, %18, %cst_20 {dimension_numbers = #tpu.dot_dimension_numbers<[1], [0], [0], [1], [0, 0, 1, 1], [], []>} : vector<4x4xf32>, vector<4x128xf32>, vector<4x128xf32> -> vector<4x128xf32>
    %cst_21 = arith.constant dense<0.000000e+00> : vector<4x128xf32>
    %20 = tpu.matmul %4, %16, %cst_21 {dimension_numbers = #tpu.dot_dimension_numbers<[1], [0], [0], [1], [0, 0, 1, 1], [], []>} : vector<4x4xf32>, vector<4x128xf32>, vector<4x128xf32> -> vector<4x128xf32>
    %cst_22 = arith.constant dense<0.000000e+00> : vector<4x128xf32>
    %21 = tpu.matmul %19, %0, %cst_22 {dimension_numbers = #tpu.dot_dimension_numbers<[1], [0], [0], [1], [0, 0, 1, 1], [], []>} : vector<4x128xf32>, vector<128x128xf32>, vector<4x128xf32> -> vector<4x128xf32>
    %22 = arith.addf %2, %21 : vector<4x128xf32>
    %cst_23 = arith.constant dense<0.000000e+00> : vector<4x128xf32>
    %23 = tpu.matmul %20, %0, %cst_23 {dimension_numbers = #tpu.dot_dimension_numbers<[1], [1], [0], [0], [0, 0, 1, 0], [], []>} : vector<4x128xf32>, vector<128x128xf32>, vector<4x128xf32> -> vector<4x128xf32>
    %24 = arith.addf %1, %23 : vector<4x128xf32>
    %c0_24 = arith.constant 0 : index
    %c0_25 = arith.constant 0 : index
    %25 = vector.load %arg7[%c0_24, %c0_25] : memref<4x128xf32, #tpu.memory_space<vmem>>, vector<4x128xf32>
    tpu.vector_store %arg7[%c0_24, %c0_25], %24 {strides = array<i32>} : memref<4x128xf32, #tpu.memory_space<vmem>>, vector<4x128xf32>,
    %c0_26 = arith.constant 0 : index
    %c0_27 = arith.constant 0 : index
    %26 = vector.load %arg8[%c0_26, %c0_27] : memref<4x128xf32, #tpu.memory_space<vmem>>, vector<4x128xf32>
    tpu.vector_store %arg8[%c0_26, %c0_27], %22 {strides = array<i32>} : memref<4x128xf32, #tpu.memory_space<vmem>>, vector<4x128xf32>,
    return
  }
}

</mosaic_0001>

<llo_original>
// kernel: tpu_custom_call.1
$region0: #{tpu_custom_call.1}
  #allocation0 [shape = 'u32[]', space=smem, size = 0x4, offset = 0x4, fixed_abs, tag = 'smem constant byte address 0x4 - core index']
  #allocation1 [shape = 'u32[72,128]{1,0:T(1,128)}', space=vmem, size = 0x9000, scoped, tag = 'internal scratch']
  %s0 = inlined_call_operand.hbm [shape: f32[8,128], index: 0, kind: input, shape index: {}]
  %s1 = inlined_call_operand.hbm [shape: bf16[128,128], index: 1, kind: input, shape index: {}]
  %s2 = inlined_call_operand.hbm [shape: f32[8,128], index: 2, kind: output, shape index: {0}]
  %s3 = inlined_call_operand.hbm [shape: f32[8,128], index: 3, kind: output, shape index: {1}]
  %4 = xla_tuple %s2, %s3
  %s5 = sld [smem:[#allocation0]]
  $region34: #{tpu_custom_call.1} parent=0
    _
  %s7 = ssub.s32 1, %s5
  %s8 = scalar_select 0, %s7, %s5
  $region1: #{tpu_custom_call.1} parent=0
    #allocation2 [shape = 'u8[4096]{0}', space=vmem, size = 0x1000, scoped, tag = 'input window, operand 0, single buffered']
    #allocation3 [shape = 's32[1]{0}', space=sflag, size = 0x4, scoped, tag = 'scoped memory for tpu_custom_call.1']
    #allocation4 [shape = 's32[1]{0}', space=sflag, size = 0x4, scoped, tag = 'scoped memory for tpu_custom_call.1']
    #allocation5 [shape = 'u8[32768]{0}', space=vmem, size = 0x8000, scoped, tag = 'input window, operand 1, single buffered']
    #allocation6 [shape = 's32[1]{0}', space=sflag, size = 0x4, scoped, tag = 'scoped memory for tpu_custom_call.1']
    #allocation7 [shape = 'u8[4096]{0}', space=vmem, size = 0x1000, scoped, tag = 'output window, operand 0, single buffered']
    #allocation8 [shape = 'u8[4096]{0}', space=vmem, size = 0x1000, scoped, tag = 'output window, operand 1, single buffered']
    #allocation9 [shape = 's32[1]{0}', space=sflag, size = 0x4, scoped, tag = 'scoped memory for tpu_custom_call.1']
    %9 = vsyncpa [#allocation3], 0
    %10 = vsyncpa [#allocation6], 0
    %11 = vsyncpa [#allocation4], 0
    %12 = vsyncpa [#allocation9], 0
    // Predicated region
    $region2: #{tpu_custom_call.1} parent=1 // pred_check
      _
    $region3: #{tpu_custom_call.1} parent=1 // pred_check_branch
      %14 = sbr.rel (0) target = $region5
    $region4: #{tpu_custom_call.1} parent=1 // pred_region
      %16 = vsyncadd [#allocation3], 0
      %s18 = sshll.u32 %s0, 4
      %s19 = int_to_ptr.hbm [resolvable:$true] %s18
      %s20 = sshll.u32 [#allocation2], 4
      %s21 = int_to_ptr.vmem [resolvable:$true] %s20
      %23 = dma.hbm_to_vmem [thread:$0]  %s19, 128, %s21, [#allocation3]
    $region5: #{tpu_custom_call.1} parent=1 // pred_fallthru
      _
    // Predicated region
    $region6: #{tpu_custom_call.1} parent=1 // pred_check
      _
    $region7: #{tpu_custom_call.1} parent=1 // pred_check_branch
      %25 = sbr.rel (0) target = $region9
    $region8: #{tpu_custom_call.1} parent=1 // pred_region
      %27 = vsyncadd [#allocation6], 0
      %s28 = sshll.u32 %s1, 4
      %s29 = int_to_ptr.hbm [resolvable:$true] %s28
      %s30 = sshll.u32 [#allocation5], 4
      %s31 = int_to_ptr.vmem [resolvable:$true] %s30
      %36 = dma.hbm_to_vmem [thread:$0]  %s29, 1024, %s31, [#allocation6], 64, 64, 4
    $region9: #{tpu_custom_call.1} parent=1 // pred_fallthru
      _
    // Predicated region
    $region10: #{tpu_custom_call.1} parent=1 // pred_check
      _
    $region11: #{tpu_custom_call.1} parent=1 // pred_check_branch
      %38 = sbr.rel (0) target = $region13
    $region12: #{tpu_custom_call.1} parent=1 // pred_region
      %40 = dma.done [#allocation3], 128
    $region13: #{tpu_custom_call.1} parent=1 // pred_fallthru
      _
    // Predicated region
    $region14: #{tpu_custom_call.1} parent=1 // pred_check
      _
    $region15: #{tpu_custom_call.1} parent=1 // pred_check_branch
      %42 = sbr.rel (0) target = $region17
    $region16: #{tpu_custom_call.1} parent=1 // pred_region
      %44 = dma.done [#allocation6], 1024
    $region17: #{tpu_custom_call.1} parent=1 // pred_fallthru
      _
    %v45 = vld [vmem:[#allocation2] sm:$0xff]
    %v46 = vld [vmem:[#allocation5] sm:$0xf]
    %v47 = vld [vmem:[#allocation5 + $0x4] sm:$0xf]
    %v48 = vld [vmem:[#allocation5 + $0x8] sm:$0xf]
    %v49 = vld [vmem:[#allocation5 + $0xc] sm:$0xf]
    %v50 = vld [vmem:[#allocation5 + $0x10] sm:$0xf]
    %v51 = vld [vmem:[#allocation5 + $0x14] sm:$0xf]
    %v52 = vld [vmem:[#allocation5 + $0x18] sm:$0xf]
    %v53 = vld [vmem:[#allocation5 + $0x1c] sm:$0xf]
    %v54 = vld [vmem:[#allocation5 + $0x20] sm:$0xf]
    %v55 = vld [vmem:[#allocation5 + $0x24] sm:$0xf]
    %v56 = vld [vmem:[#allocation5 + $0x28] sm:$0xf]
    %v57 = vld [vmem:[#allocation5 + $0x2c] sm:$0xf]
    %v58 = vld [vmem:[#allocation5 + $0x30] sm:$0xf]
    %v59 = vld [vmem:[#allocation5 + $0x34] sm:$0xf]
    %v60 = vld [vmem:[#allocation5 + $0x38] sm:$0xf]
    %v61 = vld [vmem:[#allocation5 + $0x3c] sm:$0xf]
    %v78 = vunpack.c.l.b16 %v46
    %v79 = vunpack.c.l.b16 %v47
    %v80 = vunpack.c.l.b16 %v48
    %v81 = vunpack.c.l.b16 %v49
    %v82 = vunpack.c.l.b16 %v50
    %v83 = vunpack.c.l.b16 %v51
    %v84 = vunpack.c.l.b16 %v52
    %v85 = vunpack.c.l.b16 %v53
    %v86 = vunpack.c.l.b16 %v54
    %v87 = vunpack.c.l.b16 %v55
    %v88 = vunpack.c.l.b16 %v56
    %v89 = vunpack.c.l.b16 %v57
    %v90 = vunpack.c.l.b16 %v58
    %v91 = vunpack.c.l.b16 %v59
    %v92 = vunpack.c.l.b16 %v60
    %v93 = vunpack.c.l.b16 %v61
    %v94 = vpack.c.b16 %v79, %v78
    %v95 = vpack.c.b16 %v81, %v80
    %v96 = vpack.c.b16 %v83, %v82
    %v97 = vpack.c.b16 %v85, %v84
    %v98 = vpack.c.b16 %v87, %v86
    %v99 = vpack.c.b16 %v89, %v88
    %v100 = vpack.c.b16 %v91, %v90
    %v101 = vpack.c.b16 %v93, %v92
    %110 = vmatpush.bf16.msra.mxu0 %v101
    %111 = vmatpush.bf16.msra.mxu0 %v100
    %112 = vmatpush.bf16.msra.mxu0 %v99
    %113 = vmatpush.bf16.msra.mxu0 %v98
    %114 = vmatpush.bf16.msra.mxu0 %v97
    %115 = vmatpush.bf16.msra.mxu0 %v96
    %116 = vmatpush.bf16.msra.mxu0 %v95
    %117 = vmatpush.bf16.msra.mxu0 %v94
    %118 = vmatmul.f32.gmra.mxu0 %v45
    %v119 = vpop.f32.mrf.mxu0
    %v120 = vadd.f32 0.0, %v119
    %121 = vdwg.mxu0
    %122 = vst [vmem:[#allocation7] sm:$0xff] %v120
    %123 = vmatpush.bf16.xpose.msra.mxu0 %v101
    %124 = vmatpush.bf16.xpose.msra.mxu0 %v100
    %125 = vmatpush.bf16.xpose.msra.mxu0 %v99
    %126 = vmatpush.bf16.xpose.msra.mxu0 %v98
    %127 = vmatpush.bf16.xpose.msra.mxu0 %v97
    %128 = vmatpush.bf16.xpose.msra.mxu0 %v96
    %129 = vmatpush.bf16.xpose.msra.mxu0 %v95
    %130 = vmatpush.bf16.xpose.msra.mxu0 %v94
    %131 = vmatmul.f32.gmra.mxu0 %v45
    %v132 = vpop.f32.mrf.mxu0
    %v133 = vadd.f32 0.0, %v132
    %134 = vdwg.mxu0
    %135 = vst [vmem:[#allocation8] sm:$0xff] %v133
    // Predicated region
    $region18: #{tpu_custom_call.1} parent=1 // pred_check
      _
    $region19: #{tpu_custom_call.1} parent=1 // pred_check_branch
      %137 = sbr.rel (0) target = $region21
    $region20: #{tpu_custom_call.1} parent=1 // pred_region
      %139 = vsyncadd [#allocation4], 0
      %s141 = sshll.u32 [#allocation7], 4
      %s142 = int_to_ptr.vmem [resolvable:$true] %s141
      %s143 = sshll.u32 %s2, 4
      %s144 = int_to_ptr.hbm [resolvable:$true] %s143
      %146 = dma.vmem_to_hbm [thread:$0]  %s142, 128, %s144, [#allocation4]
    $region21: #{tpu_custom_call.1} parent=1 // pred_fallthru
      _
    // Predicated region
    $region22: #{tpu_custom_call.1} parent=1 // pred_check
      _
    $region23: #{tpu_custom_call.1} parent=1 // pred_check_branch
      %148 = sbr.rel (0) target = $region25
    $region24: #{tpu_custom_call.1} parent=1 // pred_region
      %150 = vsyncadd [#allocation9], 0
      %s152 = sshll.u32 [#allocation8], 4
      %s153 = int_to_ptr.vmem [resolvable:$true] %s152
      %s154 = sshll.u32 %s3, 4
      %s155 = int_to_ptr.hbm [resolvable:$true] %s154
      %157 = dma.vmem_to_hbm [thread:$0]  %s153, 128, %s155, [#allocation9]
    $region25: #{tpu_custom_call.1} parent=1 // pred_fallthru
      _
    // Predicated region
    $region26: #{tpu_custom_call.1} parent=1 // pred_check
      _
    $region27: #{tpu_custom_call.1} parent=1 // pred_check_branch
      %159 = sbr.rel (0) target = $region29
    $region28: #{tpu_custom_call.1} parent=1 // pred_region
      %161 = dma.done [#allocation4], 128
    $region29: #{tpu_custom_call.1} parent=1 // pred_fallthru
      _
    // Predicated region
    $region30: #{tpu_custom_call.1} parent=1 // pred_check
      _
    $region31: #{tpu_custom_call.1} parent=1 // pred_check_branch
      %163 = sbr.rel (0) target = $region33
    $region32: #{tpu_custom_call.1} parent=1 // pred_region
      %165 = dma.done [#allocation9], 128
    $region33: #{tpu_custom_call.1} parent=1 // pred_fallthru
      _
    %166 = vsyncpa [#allocation3], 1
    %167 = vsyncpa [#allocation6], 1
    %168 = vsyncpa [#allocation4], 1
    %169 = vsyncpa [#allocation9], 1

// kernel: tpu_custom_call.1
$region0: #{tpu_custom_call.1}
  #allocation0 [shape = 'u32[]', space=smem, size = 0x4, offset = 0x4, fixed_abs, tag = 'smem constant byte address 0x4 - core index']
  #allocation1 [shape = 'u32[72,128]{1,0:T(1,128)}', space=vmem, size = 0x9000, scoped, tag = 'internal scratch']
  %s0 = inlined_call_operand.hbm [shape: f32[4,128], index: 0, kind: input, shape index: {}]
  %s1 = inlined_call_operand.hbm [shape: f32[4,128], index: 1, kind: input, shape index: {}]
  %s2 = inlined_call_operand.hbm [shape: f32[4,128], index: 2, kind: input, shape index: {}]
  %s3 = inlined_call_operand.hbm [shape: f32[4,128], index: 3, kind: input, shape index: {}]
  %s4 = inlined_call_operand.hbm [shape: f32[4,4], index: 4, kind: input, shape index: {}]
  %s5 = inlined_call_operand.vmem [shape: f32[4,4], index: 5, kind: input, shape index: {}]
  %s6 = inlined_call_operand.hbm [shape: f32[128,128], index: 6, kind: input, shape index: {}]
  %s7 = inlined_call_operand.hbm [shape: f32[4,128], index: 7, kind: output, shape index: {0}]
  %s8 = inlined_call_operand.hbm [shape: f32[4,128], index: 8, kind: output, shape index: {1}]
  %9 = xla_tuple %s7, %s8
  %s10 = sld [smem:[#allocation0]]
  $region70: #{tpu_custom_call.1} parent=0
    _
  %s12 = ssub.s32 1, %s10
  %s13 = scalar_select 0, %s12, %s10
  $region1: #{tpu_custom_call.1} parent=0
    #allocation2 [shape = 'u8[2048]{0}', space=vmem, size = 0x800, scoped, tag = 'input window, operand 0, single buffered']
    #allocation3 [shape = 's32[1]{0}', space=sflag, size = 0x4, scoped, tag = 'scoped memory for tpu_custom_call.1']
    #allocation4 [shape = 's32[1]{0}', space=sflag, size = 0x4, scoped, tag = 'scoped memory for tpu_custom_call.1']
    #allocation5 [shape = 'u8[2048]{0}', space=vmem, size = 0x800, scoped, tag = 'input window, operand 1, single buffered']
    #allocation6 [shape = 's32[1]{0}', space=sflag, size = 0x4, scoped, tag = 'scoped memory for tpu_custom_call.1']
    #allocation7 [shape = 'u8[2048]{0}', space=vmem, size = 0x800, scoped, tag = 'input window, operand 2, single buffered']
    #allocation8 [shape = 'u8[2048]{0}', space=vmem, size = 0x800, scoped, tag = 'input window, operand 3, single buffered']
    #allocation9 [shape = 's32[1]{0}', space=sflag, size = 0x4, scoped, tag = 'scoped memory for tpu_custom_call.1']
    #allocation10 [shape = 'u8[2048]{0}', space=vmem, size = 0x800, scoped, tag = 'input window, operand 4, single buffered']
    #allocation11 [shape = 'u8[65536]{0}', space=vmem, size = 0x10000, scoped, tag = 'input window, operand 6, single buffered']
    #allocation12 [shape = 's32[1]{0}', space=sflag, size = 0x4, scoped, tag = 'scoped memory for tpu_custom_call.1']
    #allocation13 [shape = 'u8[2048]{0}', space=vmem, size = 0x800, scoped, tag = 'output window, operand 0, single buffered']
    #allocation14 [shape = 'u8[2048]{0}', space=vmem, size = 0x800, scoped, tag = 'output window, operand 1, single buffered']
    #allocation15 [shape = 's32[1]{0}', space=sflag, size = 0x4, scoped, tag = 'scoped memory for tpu_custom_call.1']
    %14 = vsyncpa [#allocation3], 0
    %15 = vsyncpa [#allocation6], 0
    %16 = vsyncpa [#allocation9], 0
    %17 = vsyncpa [#allocation12], 0
    %18 = vsyncpa [#allocation4], 0
    %19 = vsyncpa [#allocation15], 0
    // Predicated region
    $region2: #{tpu_custom_call.1} parent=1 // pred_check
      _
    $region3: #{tpu_custom_call.1} parent=1 // pred_check_branch
      %21 = sbr.rel (0) target = $region5
    $region4: #{tpu_custom_call.1} parent=1 // pred_region
      %23 = vsyncadd [#allocation3], 0
      %s25 = sshll.u32 %s0, 4
      %s26 = int_to_ptr.hbm [resolvable:$true] %s25
      %s27 = sshll.u32 [#allocation2], 4
      %s28 = int_to_ptr.vmem [resolvable:$true] %s27
      %30 = dma.hbm_to_vmem [thread:$0]  %s26, 64, %s28, [#allocation3]
    $region5: #{tpu_custom_call.1} parent=1 // pred_fallthru
      _
    // Predicated region
    $region6: #{tpu_custom_call.1} parent=1 // pred_check
      _
    $region7: #{tpu_custom_call.1} parent=1 // pred_check_branch
      %32 = sbr.rel (0) target = $region9
    $region8: #{tpu_custom_call.1} parent=1 // pred_region
      %34 = vsyncadd [#allocation6], 0
      %s36 = sshll.u32 %s1, 4
      %s37 = int_to_ptr.hbm [resolvable:$true] %s36
      %s38 = sshll.u32 [#allocation5], 4
      %s39 = int_to_ptr.vmem [resolvable:$true] %s38
      %41 = dma.hbm_to_vmem [thread:$0]  %s37, 64, %s39, [#allocation6]
    $region9: #{tpu_custom_call.1} parent=1 // pred_fallthru
      _
    // Predicated region
    $region10: #{tpu_custom_call.1} parent=1 // pred_check
      _
    $region11: #{tpu_custom_call.1} parent=1 // pred_check_branch
      %43 = sbr.rel (0) target = $region13
    $region12: #{tpu_custom_call.1} parent=1 // pred_region
      %45 = vsyncadd [#allocation6], 0
      %s47 = sshll.u32 %s2, 4
      %s48 = int_to_ptr.hbm [resolvable:$true] %s47
      %s49 = sshll.u32 [#allocation7], 4
      %s50 = int_to_ptr.vmem [resolvable:$true] %s49
      %52 = dma.hbm_to_vmem [thread:$0]  %s48, 64, %s50, [#allocation6]
    $region13: #{tpu_custom_call.1} parent=1 // pred_fallthru
      _
    // Predicated region
    $region14: #{tpu_custom_call.1} parent=1 // pred_check
      _
    $region15: #{tpu_custom_call.1} parent=1 // pred_check_branch
      %54 = sbr.rel (0) target = $region17
    $region16: #{tpu_custom_call.1} parent=1 // pred_region
      %56 = vsyncadd [#allocation9], 0
      %s58 = sshll.u32 %s3, 4
      %s59 = int_to_ptr.hbm [resolvable:$true] %s58
      %s60 = sshll.u32 [#allocation8], 4
      %s61 = int_to_ptr.vmem [resolvable:$true] %s60
      %63 = dma.hbm_to_vmem [thread:$0]  %s59, 64, %s61, [#allocation9]
    $region17: #{tpu_custom_call.1} parent=1 // pred_fallthru
      _
    // Predicated region
    $region18: #{tpu_custom_call.1} parent=1 // pred_check
      _
    $region19: #{tpu_custom_call.1} parent=1 // pred_check_branch
      %65 = sbr.rel (0) target = $region21
    $region20: #{tpu_custom_call.1} parent=1 // pred_region
      %67 = vsyncadd [#allocation9], 0
      %s69 = sshll.u32 %s4, 4
      %s70 = int_to_ptr.hbm [resolvable:$true] %s69
      %s71 = sshll.u32 [#allocation10], 4
      %s72 = int_to_ptr.vmem [resolvable:$true] %s71
      %74 = dma.hbm_to_vmem [thread:$0]  %s70, 64, %s72, [#allocation9]
    $region21: #{tpu_custom_call.1} parent=1 // pred_fallthru
      _
    // Predicated region
    $region22: #{tpu_custom_call.1} parent=1 // pred_check
      _
    $region23: #{tpu_custom_call.1} parent=1 // pred_check_branch
      %76 = sbr.rel (0) target = $region25
    $region24: #{tpu_custom_call.1} parent=1 // pred_region
      _
    $region25: #{tpu_custom_call.1} parent=1 // pred_fallthru
      _
    // Predicated region
    $region26: #{tpu_custom_call.1} parent=1 // pred_check
      _
    $region27: #{tpu_custom_call.1} parent=1 // pred_check_branch
      %78 = sbr.rel (0) target = $region29
    $region28: #{tpu_custom_call.1} parent=1 // pred_region
      %80 = vsyncadd [#allocation12], 0
      %s81 = sshll.u32 %s6, 4
      %s82 = int_to_ptr.hbm [resolvable:$true] %s81
      %s83 = sshll.u32 [#allocation11], 4
      %s84 = int_to_ptr.vmem [resolvable:$true] %s83
      %89 = dma.hbm_to_vmem [thread:$0]  %s82, 2048, %s84, [#allocation12], 128, 128, 8
    $region29: #{tpu_custom_call.1} parent=1 // pred_fallthru
      _
    // Predicated region
    $region30: #{tpu_custom_call.1} parent=1 // pred_check
      _
    $region31: #{tpu_custom_call.1} parent=1 // pred_check_branch
      %91 = sbr.rel (0) target = $region33
    $region32: #{tpu_custom_call.1} parent=1 // pred_region
      %93 = dma.done [#allocation3], 64
    $region33: #{tpu_custom_call.1} parent=1 // pred_fallthru
      _
    // Predicated region
    $region34: #{tpu_custom_call.1} parent=1 // pred_check
      _
    $region35: #{tpu_custom_call.1} parent=1 // pred_check_branch
      %95 = sbr.rel (0) target = $region37
    $region36: #{tpu_custom_call.1} parent=1 // pred_region
      %97 = dma.done [#allocation6], 64
    $region37: #{tpu_custom_call.1} parent=1 // pred_fallthru
      _
    // Predicated region
    $region38: #{tpu_custom_call.1} parent=1 // pred_check
      _
    $region39: #{tpu_custom_call.1} parent=1 // pred_check_branch
      %99 = sbr.rel (0) target = $region41
    $region40: #{tpu_custom_call.1} parent=1 // pred_region
      %101 = dma.done [#allocation6], 64
    $region41: #{tpu_custom_call.1} parent=1 // pred_fallthru
      _
    // Predicated region
    $region42: #{tpu_custom_call.1} parent=1 // pred_check
      _
    $region43: #{tpu_custom_call.1} parent=1 // pred_check_branch
      %103 = sbr.rel (0) target = $region45
    $region44: #{tpu_custom_call.1} parent=1 // pred_region
      %105 = dma.done [#allocation9], 64
    $region45: #{tpu_custom_call.1} parent=1 // pred_fallthru
      _
    // Predicated region
    $region46: #{tpu_custom_call.1} parent=1 // pred_check
      _
    $region47: #{tpu_custom_call.1} parent=1 // pred_check_branch
      %107 = sbr.rel (0) target = $region49
    $region48: #{tpu_custom_call.1} parent=1 // pred_region
      %109 = dma.done [#allocation9], 64
    $region49: #{tpu_custom_call.1} parent=1 // pred_fallthru
      _
    // Predicated region
    $region50: #{tpu_custom_call.1} parent=1 // pred_check
      _
    $region51: #{tpu_custom_call.1} parent=1 // pred_check_branch
      %111 = sbr.rel (0) target = $region53
    $region52: #{tpu_custom_call.1} parent=1 // pred_region
      %113 = dma.done [#allocation12], 2048
    $region53: #{tpu_custom_call.1} parent=1 // pred_fallthru
      _
    %v114 = vld [vmem:[#allocation11] sm:$0xff]
    %v115 = vld [vmem:[#allocation11 + $0x8] sm:$0xff]
    %v116 = vld [vmem:[#allocation11 + $0x10] sm:$0xff]
    %v117 = vld [vmem:[#allocation11 + $0x18] sm:$0xff]
    %v118 = vld [vmem:[#allocation11 + $0x20] sm:$0xff]
    %v119 = vld [vmem:[#allocation11 + $0x28] sm:$0xff]
    %v120 = vld [vmem:[#allocation11 + $0x30] sm:$0xff]
    %v121 = vld [vmem:[#allocation11 + $0x38] sm:$0xff]
    %v122 = vld [vmem:[#allocation11 + $0x40] sm:$0xff]
    %v123 = vld [vmem:[#allocation11 + $0x48] sm:$0xff]
    %v124 = vld [vmem:[#allocation11 + $0x50] sm:$0xff]
    %v125 = vld [vmem:[#allocation11 + $0x58] sm:$0xff]
    %v126 = vld [vmem:[#allocation11 + $0x60] sm:$0xff]
    %v127 = vld [vmem:[#allocation11 + $0x68] sm:$0xff]
    %v128 = vld [vmem:[#allocation11 + $0x70] sm:$0xff]
    %v129 = vld [vmem:[#allocation11 + $0x78] sm:$0xff]
    %v130 = vld [vmem:[#allocation2] sm:$0xf]
    %v131 = vld [vmem:[#allocation5] sm:$0xf]
    %v132 = vld [vmem:[#allocation10] sm:$0xf]
    %v133 = vld [vmem:[%s5] sm:$0xf]
    %v134 = vld [vmem:[#allocation7] sm:$0xf]
    %v135 = vld [vmem:[#allocation8] sm:$0xf]
    %vm136 = vcmask 31744
    %v138 = vsel %vm136, %v132, 0
    %vm140 = vcmask 1043456
    %v142 = vsel %vm140, %v134, 0
    %144 = vmatpush.msra.mxu0 0.0
    %145 = vmatpush.msra.mxu0 0.0
    %146 = vmatpush.msra.mxu0 0.0
    %147 = vmatpush.msra.mxu0 0.0
    %148 = vmatpush.msra.mxu0 0.0
    %149 = vmatpush.msra.mxu0 0.0
    %150 = vmatpush.msra.mxu0 0.0
    %151 = vmatpush.msra.mxu0 0.0
    %152 = vmatpush.msra.mxu0 0.0
    %153 = vmatpush.msra.mxu0 0.0
    %154 = vmatpush.msra.mxu0 0.0
    %155 = vmatpush.msra.mxu0 0.0
    %156 = vmatpush.msra.mxu0 0.0
    %157 = vmatpush.msra.mxu0 0.0
    %158 = vmatpush.msra.mxu0 0.0
    %159 = vmatpush.msra.mxu0 %v142
    %160 = vmatmul.f32.gmra.mxu0 %v138
    %v161 = vpop.f32.mrf.mxu0
    %v162 = vadd.f32 0.0, %v161
    %163 = vdwg.mxu0
    %v165 = vsel %vm136, %v133, 0
    %v168 = vsel %vm140, %v135, 0
    %170 = vmatpush.msra.mxu0 0.0
    %171 = vmatpush.msra.mxu0 0.0
    %172 = vmatpush.msra.mxu0 0.0
    %173 = vmatpush.msra.mxu0 0.0
    %174 = vmatpush.msra.mxu0 0.0
    %175 = vmatpush.msra.mxu0 0.0
    %176 = vmatpush.msra.mxu0 0.0
    %177 = vmatpush.msra.mxu0 0.0
    %178 = vmatpush.msra.mxu0 0.0
    %179 = vmatpush.msra.mxu0 0.0
    %180 = vmatpush.msra.mxu0 0.0
    %181 = vmatpush.msra.mxu0 0.0
    %182 = vmatpush.msra.mxu0 0.0
    %183 = vmatpush.msra.mxu0 0.0
    %184 = vmatpush.msra.mxu0 0.0
    %185 = vmatpush.msra.mxu0 %v168
    %186 = vmatmul.f32.gmra.mxu0 %v165
    %v187 = vpop.f32.mrf.mxu0
    %v188 = vadd.f32 0.0, %v187
    %189 = vdwg.mxu0
    %190 = vmatpush.msra.mxu0 %v129
    %191 = vmatpush.msra.mxu0 %v128
    %192 = vmatpush.msra.mxu0 %v127
    %193 = vmatpush.msra.mxu0 %v126
    %194 = vmatpush.msra.mxu0 %v125
    %195 = vmatpush.msra.mxu0 %v124
    %196 = vmatpush.msra.mxu0 %v123
    %197 = vmatpush.msra.mxu0 %v122
    %198 = vmatpush.msra.mxu0 %v121
    %199 = vmatpush.msra.mxu0 %v120
    %200 = vmatpush.msra.mxu0 %v119
    %201 = vmatpush.msra.mxu0 %v118
    %202 = vmatpush.msra.mxu0 %v117
    %203 = vmatpush.msra.mxu0 %v116
    %204 = vmatpush.msra.mxu0 %v115
    %205 = vmatpush.msra.mxu0 %v114
    %206 = vmatmul.f32.gmra.mxu0 %v162
    %v207 = vpop.f32.mrf.mxu0
    %v208 = vadd.f32 0.0, %v207
    %209 = vdwg.mxu0
    %v210 = vadd.f32 %v131, %v208
    %211 = vmatpush.xpose.msra.mxu0 %v129
    %212 = vmatpush.xpose.msra.mxu0 %v128
    %213 = vmatpush.xpose.msra.mxu0 %v127
    %214 = vmatpush.xpose.msra.mxu0 %v126
    %215 = vmatpush.xpose.msra.mxu0 %v125
    %216 = vmatpush.xpose.msra.mxu0 %v124
    %217 = vmatpush.xpose.msra.mxu0 %v123
    %218 = vmatpush.xpose.msra.mxu0 %v122
    %219 = vmatpush.xpose.msra.mxu0 %v121
    %220 = vmatpush.xpose.msra.mxu0 %v120
    %221 = vmatpush.xpose.msra.mxu0 %v119
    %222 = vmatpush.xpose.msra.mxu0 %v118
    %223 = vmatpush.xpose.msra.mxu0 %v117
    %224 = vmatpush.xpose.msra.mxu0 %v116
    %225 = vmatpush.xpose.msra.mxu0 %v115
    %226 = vmatpush.xpose.msra.mxu0 %v114
    %227 = vmatmul.f32.gmra.mxu0 %v188
    %v228 = vpop.f32.mrf.mxu0
    %v229 = vadd.f32 0.0, %v228
    %230 = vdwg.mxu0
    %v231 = vadd.f32 %v130, %v229
    %v233 = vsel %vm140, %v231, 0
    %235 = vmatpush.msra.mxu0 0.0
    %236 = vmatpush.msra.mxu0 0.0
    %237 = vmatpush.msra.mxu0 0.0
    %238 = vmatpush.msra.mxu0 0.0
    %239 = vmatpush.msra.mxu0 0.0
    %240 = vmatpush.msra.mxu0 0.0
    %241 = vmatpush.msra.mxu0 0.0
    %242 = vmatpush.msra.mxu0 0.0
    %243 = vmatpush.msra.mxu0 0.0
    %244 = vmatpush.msra.mxu0 0.0
    %245 = vmatpush.msra.mxu0 0.0
    %246 = vmatpush.msra.mxu0 0.0
    %247 = vmatpush.msra.mxu0 0.0
    %248 = vmatpush.msra.mxu0 0.0
    %249 = vmatpush.msra.mxu0 0.0
    %250 = vmatpush.msra.mxu0 %v233
    %251 = vmatmul.f32.gmra.mxu0 %v138
    %v252 = vpop.f32.mrf.mxu0
    %v253 = vadd.f32 0.0, %v252
    %254 = vdwg.mxu0
    %v256 = vsel %vm140, %v210, 0
    %258 = vmatpush.msra.mxu0 0.0
    %259 = vmatpush.msra.mxu0 0.0
    %260 = vmatpush.msra.mxu0 0.0
    %261 = vmatpush.msra.mxu0 0.0
    %262 = vmatpush.msra.mxu0 0.0
    %263 = vmatpush.msra.mxu0 0.0
    %264 = vmatpush.msra.mxu0 0.0
    %265 = vmatpush.msra.mxu0 0.0
    %266 = vmatpush.msra.mxu0 0.0
    %267 = vmatpush.msra.mxu0 0.0
    %268 = vmatpush.msra.mxu0 0.0
    %269 = vmatpush.msra.mxu0 0.0
    %270 = vmatpush.msra.mxu0 0.0
    %271 = vmatpush.msra.mxu0 0.0
    %272 = vmatpush.msra.mxu0 0.0
    %273 = vmatpush.msra.mxu0 %v256
    %274 = vmatmul.f32.gmra.mxu0 %v165
    %v275 = vpop.f32.mrf.mxu0
    %v276 = vadd.f32 0.0, %v275
    %277 = vdwg.mxu0
    %278 = vmatpush.msra.mxu0 %v129
    %279 = vmatpush.msra.mxu0 %v128
    %280 = vmatpush.msra.mxu0 %v127
    %281 = vmatpush.msra.mxu0 %v126
    %282 = vmatpush.msra.mxu0 %v125
    %283 = vmatpush.msra.mxu0 %v124
    %284 = vmatpush.msra.mxu0 %v123
    %285 = vmatpush.msra.mxu0 %v122
    %286 = vmatpush.msra.mxu0 %v121
    %287 = vmatpush.msra.mxu0 %v120
    %288 = vmatpush.msra.mxu0 %v119
    %289 = vmatpush.msra.mxu0 %v118
    %290 = vmatpush.msra.mxu0 %v117
    %291 = vmatpush.msra.mxu0 %v116
    %292 = vmatpush.msra.mxu0 %v115
    %293 = vmatpush.msra.mxu0 %v114
    %294 = vmatmul.f32.gmra.mxu0 %v253
    %v295 = vpop.f32.mrf.mxu0
    %v296 = vadd.f32 0.0, %v295
    %297 = vdwg.mxu0
    %v298 = vadd.f32 %v131, %v296
    %299 = vmatpush.xpose.msra.mxu0 %v129
    %300 = vmatpush.xpose.msra.mxu0 %v128
    %301 = vmatpush.xpose.msra.mxu0 %v127
    %302 = vmatpush.xpose.msra.mxu0 %v126
    %303 = vmatpush.xpose.msra.mxu0 %v125
    %304 = vmatpush.xpose.msra.mxu0 %v124
    %305 = vmatpush.xpose.msra.mxu0 %v123
    %306 = vmatpush.xpose.msra.mxu0 %v122
    %307 = vmatpush.xpose.msra.mxu0 %v121
    %308 = vmatpush.xpose.msra.mxu0 %v120
    %309 = vmatpush.xpose.msra.mxu0 %v119
    %310 = vmatpush.xpose.msra.mxu0 %v118
    %311 = vmatpush.xpose.msra.mxu0 %v117
    %312 = vmatpush.xpose.msra.mxu0 %v116
    %313 = vmatpush.xpose.msra.mxu0 %v115
    %314 = vmatpush.xpose.msra.mxu0 %v114
    %315 = vmatmul.f32.gmra.mxu0 %v276
    %v316 = vpop.f32.mrf.mxu0
    %v317 = vadd.f32 0.0, %v316
    %318 = vdwg.mxu0
    %v319 = vadd.f32 %v130, %v317
    %v321 = vsel %vm140, %v319, 0
    %323 = vmatpush.msra.mxu0 0.0
    %324 = vmatpush.msra.mxu0 0.0
    %325 = vmatpush.msra.mxu0 0.0
    %326 = vmatpush.msra.mxu0 0.0
    %327 = vmatpush.msra.mxu0 0.0
    %328 = vmatpush.msra.mxu0 0.0
    %329 = vmatpush.msra.mxu0 0.0
    %330 = vmatpush.msra.mxu0 0.0
    %331 = vmatpush.msra.mxu0 0.0
    %332 = vmatpush.msra.mxu0 0.0
    %333 = vmatpush.msra.mxu0 0.0
    %334 = vmatpush.msra.mxu0 0.0
    %335 = vmatpush.msra.mxu0 0.0
    %336 = vmatpush.msra.mxu0 0.0
    %337 = vmatpush.msra.mxu0 0.0
    %338 = vmatpush.msra.mxu0 %v321
    %339 = vmatmul.f32.gmra.mxu0 %v138
    %v340 = vpop.f32.mrf.mxu0
    %v341 = vadd.f32 0.0, %v340
    %342 = vdwg.mxu0
    %v344 = vsel %vm140, %v298, 0
    %346 = vmatpush.msra.mxu0 0.0
    %347 = vmatpush.msra.mxu0 0.0
    %348 = vmatpush.msra.mxu0 0.0
    %349 = vmatpush.msra.mxu0 0.0
    %350 = vmatpush.msra.mxu0 0.0
    %351 = vmatpush.msra.mxu0 0.0
    %352 = vmatpush.msra.mxu0 0.0
    %353 = vmatpush.msra.mxu0 0.0
    %354 = vmatpush.msra.mxu0 0.0
    %355 = vmatpush.msra.mxu0 0.0
    %356 = vmatpush.msra.mxu0 0.0
    %357 = vmatpush.msra.mxu0 0.0
    %358 = vmatpush.msra.mxu0 0.0
    %359 = vmatpush.msra.mxu0 0.0
    %360 = vmatpush.msra.mxu0 0.0
    %361 = vmatpush.msra.mxu0 %v344
    %362 = vmatmul.f32.gmra.mxu0 %v165
    %v363 = vpop.f32.mrf.mxu0
    %v364 = vadd.f32 0.0, %v363
    %365 = vdwg.mxu0
    %366 = vmatpush.msra.mxu0 %v129
    %367 = vmatpush.msra.mxu0 %v128
    %368 = vmatpush.msra.mxu0 %v127
    %369 = vmatpush.msra.mxu0 %v126
    %370 = vmatpush.msra.mxu0 %v125
    %371 = vmatpush.msra.mxu0 %v124
    %372 = vmatpush.msra.mxu0 %v123
    %373 = vmatpush.msra.mxu0 %v122
    %374 = vmatpush.msra.mxu0 %v121
    %375 = vmatpush.msra.mxu0 %v120
    %376 = vmatpush.msra.mxu0 %v119
    %377 = vmatpush.msra.mxu0 %v118
    %378 = vmatpush.msra.mxu0 %v117
    %379 = vmatpush.msra.mxu0 %v116
    %380 = vmatpush.msra.mxu0 %v115
    %381 = vmatpush.msra.mxu0 %v114
    %382 = vmatmul.f32.gmra.mxu0 %v341
    %v383 = vpop.f32.mrf.mxu0
    %v384 = vadd.f32 0.0, %v383
    %385 = vdwg.mxu0
    %v386 = vadd.f32 %v131, %v384
    %387 = vmatpush.xpose.msra.mxu0 %v129
    %388 = vmatpush.xpose.msra.mxu0 %v128
    %389 = vmatpush.xpose.msra.mxu0 %v127
    %390 = vmatpush.xpose.msra.mxu0 %v126
    %391 = vmatpush.xpose.msra.mxu0 %v125
    %392 = vmatpush.xpose.msra.mxu0 %v124
    %393 = vmatpush.xpose.msra.mxu0 %v123
    %394 = vmatpush.xpose.msra.mxu0 %v122
    %395 = vmatpush.xpose.msra.mxu0 %v121
    %396 = vmatpush.xpose.msra.mxu0 %v120
    %397 = vmatpush.xpose.msra.mxu0 %v119
    %398 = vmatpush.xpose.msra.mxu0 %v118
    %399 = vmatpush.xpose.msra.mxu0 %v117
    %400 = vmatpush.xpose.msra.mxu0 %v116
    %401 = vmatpush.xpose.msra.mxu0 %v115
    %402 = vmatpush.xpose.msra.mxu0 %v114
    %403 = vmatmul.f32.gmra.mxu0 %v364
    %v404 = vpop.f32.mrf.mxu0
    %v405 = vadd.f32 0.0, %v404
    %406 = vdwg.mxu0
    %v407 = vadd.f32 %v130, %v405
    %408 = vst [vmem:[#allocation13] sm:$0xf] %v407
    %409 = vst [vmem:[#allocation14] sm:$0xf] %v386
    // Predicated region
    $region54: #{tpu_custom_call.1} parent=1 // pred_check
      _
    $region55: #{tpu_custom_call.1} parent=1 // pred_check_branch
      %411 = sbr.rel (0) target = $region57
    $region56: #{tpu_custom_call.1} parent=1 // pred_region
      %413 = vsyncadd [#allocation4], 0
      %s415 = sshll.u32 [#allocation13], 4
      %s416 = int_to_ptr.vmem [resolvable:$true] %s415
      %s417 = sshll.u32 %s7, 4
      %s418 = int_to_ptr.hbm [resolvable:$true] %s417
      %420 = dma.vmem_to_hbm [thread:$0]  %s416, 64, %s418, [#allocation4]
    $region57: #{tpu_custom_call.1} parent=1 // pred_fallthru
      _
    // Predicated region
    $region58: #{tpu_custom_call.1} parent=1 // pred_check
      _
    $region59: #{tpu_custom_call.1} parent=1 // pred_check_branch
      %422 = sbr.rel (0) target = $region61
    $region60: #{tpu_custom_call.1} parent=1 // pred_region
      %424 = vsyncadd [#allocation15], 0
      %s426 = sshll.u32 [#allocation14], 4
      %s427 = int_to_ptr.vmem [resolvable:$true] %s426
      %s428 = sshll.u32 %s8, 4
      %s429 = int_to_ptr.hbm [resolvable:$true] %s428
      %431 = dma.vmem_to_hbm [thread:$0]  %s427, 64, %s429, [#allocation15]
    $region61: #{tpu_custom_call.1} parent=1 // pred_fallthru
      _
    // Predicated region
    $region62: #{tpu_custom_call.1} parent=1 // pred_check
      _
    $region63: #{tpu_custom_call.1} parent=1 // pred_check_branch
      %433 = sbr.rel (0) target = $region65
    $region64: #{tpu_custom_call.1} parent=1 // pred_region
      %435 = dma.done [#allocation4], 64
    $region65: #{tpu_custom_call.1} parent=1 // pred_fallthru
      _
    // Predicated region
    $region66: #{tpu_custom_call.1} parent=1 // pred_check
      _
    $region67: #{tpu_custom_call.1} parent=1 // pred_check_branch
      %437 = sbr.rel (0) target = $region69
    $region68: #{tpu_custom_call.1} parent=1 // pred_region
      %439 = dma.done [#allocation15], 64
    $region69: #{tpu_custom_call.1} parent=1 // pred_fallthru
      _
    %440 = vsyncpa [#allocation3], 1
    %441 = vsyncpa [#allocation6], 1
    %442 = vsyncpa [#allocation9], 1
    %443 = vsyncpa [#allocation12], 1
    %444 = vsyncpa [#allocation4], 1
    %445 = vsyncpa [#allocation15], 1

</llo_original>
